<compile_context>
chip_gen: v7x
topology: tpu7x:2x2x1
jax: 0.10.0
libtpu: 0.0.40
codegen_flags: <defaults>
</compile_context>

<pallas_src>
import functools

import jax
import jax.numpy as jnp
from jax.experimental import pallas as pl
from jax.experimental.pallas import tpu as pltpu


def _round_up(x, m):
    return ((x + m - 1) // m) * m


def _fcnet_kernel(x_ref, w_ref, b_ref, o_ref, acc_ref, *, num_labels):
    # x_ref: (tm, tk)   w_ref: (tk, L_pad)   b_ref: (1, L)
    # o_ref: (tm, L)    acc_ref: (tm, L_pad) f32 scratch (resident across K).
    k = pl.program_id(1)

    @pl.when(k == 0)
    def _init():
        acc_ref[...] = jnp.zeros_like(acc_ref)

    # Native-dtype operands straight into the MXU, f32 accumulation.
    acc_ref[...] += jnp.dot(x_ref[...], w_ref[...],
                            preferred_element_type=jnp.float32)

    @pl.when(k == pl.num_programs(1) - 1)
    def _finalize():
        scores = acc_ref[...][:, :num_labels]             # drop zero lane padding
        scores = scores + b_ref[...].astype(jnp.float32)  # bias add on the VPU
        o_ref[...] = scores.astype(o_ref.dtype)


def prepare_fcnet_params(weight, bias, param_dtype=None):
    """One-time parameter layout prep (call at load time, NOT per forward).

    weight: [L, D] (PyTorch nn.Linear convention), bias: [L].
    Returns (w_t, b2d): w_t is [D, L_pad] (pre-transposed, zero-padded to a
    128-lane-dense block for the MXU); b2d is [1, L] (unpadded).
    Pass param_dtype=jnp.bfloat16 to halve weight HBM traffic; the kernel still
    accumulates in f32.
    """
    L, D = weight.shape
    if param_dtype is not None:
        weight = weight.astype(param_dtype)
        bias = bias.astype(param_dtype)
    L_pad = _round_up(L, 128)
    w_t = jnp.zeros((D, L_pad), dtype=weight.dtype).at[:, :L].set(weight.T)
    b2d = bias.reshape(1, L)
    return w_t, b2d


def _choose_tiles(B, D, L, L_pad, x_itemsize, w_itemsize, out_itemsize, block_rows):
    # K tile: full D when modest; otherwise the largest 128-multiple divisor of
    # D (so the ragged-K case never arises and no x padding copy is needed).
    tk = D
    if D > 2048:
        for cand in (2048, 1792, 1536, 1280, 1024, 896, 768, 640, 512, 384, 256, 128):
            if D % cand == 0:
                tk = cand
                break

    # Row tile: multiple of 8, capped by block_rows and a conservative VMEM
    # budget (fits v5e's 16 MiB default scoped VMEM; v6e/v7x have >= 32 MiB).
    budget = 12 * 1024 * 1024
    fixed = 2 * tk * L_pad * w_itemsize + 2 * L * w_itemsize          # weight + bias (double-buffered)
    per_row = 2 * tk * x_itemsize + 2 * L * out_itemsize + L_pad * 4  # x, out (double-buffered), f32 acc
    max_rows = max(8, ((budget - fixed) // per_row) // 8 * 8)
    tm = min(block_rows, _round_up(B, 8), max_rows)
    return max(8, tm), tk


@functools.partial(jax.jit,
                   static_argnames=("block_rows", "force_pallas", "out_dtype"))
def fcnet_forward(x, w_t, b2d, *, block_rows=1024, force_pallas=False,
                  out_dtype=None):
    """FCNet forward: x @ weight.T + bias, with params from prepare_fcnet_params.

    x: [B, D]    w_t: [D, L_pad]    b2d: [1, L]    returns [B, L]
    """
    B, D = x.shape
    L = b2d.shape[1]
    L_pad = w_t.shape[1]
    out_dtype = x.dtype if out_dtype is None else out_dtype

    # Tiny-problem fast path: a pallas_call launch + DMA costs more than the
    # whole fused XLA dot at toy sizes.
    if not force_pallas and B * D * L_pad < (1 << 18):
        scores = jnp.dot(x, w_t[:, :L], preferred_element_type=jnp.float32)
        return (scores + b2d[0].astype(jnp.float32)).astype(out_dtype)

    tm, tk = _choose_tiles(B, D, L, L_pad, x.dtype.itemsize, w_t.dtype.itemsize,
                           jnp.dtype(out_dtype).itemsize, block_rows)
    grid = (pl.cdiv(B, tm), D // tk)

    return pl.pallas_call(
        functools.partial(_fcnet_kernel, num_labels=L),
        out_shape=jax.ShapeDtypeStruct((B, L), out_dtype),
        grid_spec=pltpu.PrefetchScalarGridSpec(
            num_scalar_prefetch=0,
            grid=grid,
            in_specs=[
                # x tile (tm, tk); ragged last row tile handled by Pallas
                # (reads clamped, OOB output rows discarded).
                pl.BlockSpec((tm, tk), lambda i, k: (i, k)),
                # Weight K-slab, lane-dense N. With a single K tile (small D)
                # its block index is constant, so it is DMA'd once and reused
                # across all row tiles.
                pl.BlockSpec((tk, L_pad), lambda i, k: (k, 0)),
                # Bias, unpadded.
                pl.BlockSpec((1, L), lambda i, k: (0, 0)),
            ],
            # Unpadded (tm, L) output block: no lane-padding write amplification.
            out_specs=pl.BlockSpec((tm, L), lambda i, k: (i, 0)),
            scratch_shapes=[pltpu.VMEM((tm, L_pad), jnp.float32)],
        ),
        compiler_params=pltpu.CompilerParams(
            # Rows are independent -> "parallel"; K is a reduction -> "arbitrary".
            dimension_semantics=("parallel", "arbitrary"),
        ),
    )(x, w_t, b2d)


if __name__ == "__main__":
    input_dim, num_labels = 32, 2

    key = jax.random.PRNGKey(0)
    kx1, kx2, kw, kb = jax.random.split(key, 4)

    # Deterministic synthetic parameters mirroring nn.Linear shapes / init range.
    bound = 1.0 / (input_dim ** 0.5)
    weight = jax.random.uniform(kw, (num_labels, input_dim),
                                minval=-bound, maxval=bound, dtype=jnp.float32)
    bias = jax.random.uniform(kb, (num_labels,),
                              minval=-bound, maxval=bound, dtype=jnp.float32)

    # One-time parameter prep (hoisted out of the per-call path).
    w_t, b2d = prepare_fcnet_params(weight, bias)

    def ref_fn(x):
        return jnp.dot(x, weight.T, precision=jax.lax.Precision.HIGHEST) + bias

    # Case 1: small FCNet-sized batch; force the Pallas path so the kernel runs.
    x1 = jax.random.normal(kx1, (8, input_dim), dtype=jnp.float32)
    out1 = jax.block_until_ready(fcnet_forward(x1, w_t, b2d, force_pallas=True))
    assert out1.shape == (8, num_labels)
    assert jnp.allclose(out1, ref_fn(x1), atol=1e-4, rtol=1e-4)

    # Case 2: ragged batch (not a multiple of the row tile) exercises the
    # multi-tile grid and the masked last tile without any batch-padding copy.
    x2 = jax.random.normal(kx2, (200, input_dim), dtype=jnp.float32)
    out2 = jax.block_until_ready(
        fcnet_forward(x2, w_t, b2d, block_rows=128, force_pallas=True))
    assert out2.shape == (200, num_labels)
    assert jnp.allclose(out2, ref_fn(x2), atol=1e-4, rtol=1e-4)

    print("KERNEL_OK")
</pallas_src>

<mosaic_0001>
module attributes {stable_mosaic.version = 11 : i64} {
  func.func @_fcnet_kernel(%arg0: i32, %arg1: i32, %arg2: memref<8x32xf32, #tpu.memory_space<vmem>>, %arg3: memref<32x128xf32, #tpu.memory_space<vmem>>, %arg4: memref<1x2xf32, #tpu.memory_space<vmem>>, %arg5: memref<8x2xf32, #tpu.memory_space<vmem>>, %arg6: memref<8x128xf32, #tpu.memory_space<vmem>>) attributes {dimension_semantics = [#tpu.dimension_semantics<parallel>, #tpu.dimension_semantics<arbitrary>], iteration_bounds = array<i64: 1, 1>, scalar_prefetch = 0 : i64, scratch_operands = 1 : i64, tpu.core_type = #tpu.core_type<tc>, window_params = [{transform_indices = @transform_0, window_bounds = array<i64: 8, 32>}, {transform_indices = @transform_1, window_bounds = array<i64: 32, 128>}, {pipeline_mode = #tpu.pipeline_mode<synchronous>, transform_indices = @transform_2, window_bounds = array<i64: 1, 2>}, {transform_indices = @transform_3, window_bounds = array<i64: 8, 2>}]} {
    %c0_i32 = arith.constant 0 : i32
    %0 = arith.cmpi eq, %arg1, %c0_i32 : i32
    %1 = arith.extui %0 : i1 to i32
    %c0_i32_0 = arith.constant 0 : i32
    %2 = arith.cmpi ne, %1, %c0_i32_0 : i32
    scf.if %2 {
      %cst_10 = arith.constant 0.000000e+00 : f32
      %12 = vector.broadcast %cst_10 : f32 to vector<8x128xf32>
      %c0_11 = arith.constant 0 : index
      %c0_12 = arith.constant 0 : index
      %13 = vector.load %arg6[%c0_11, %c0_12] : memref<8x128xf32, #tpu.memory_space<vmem>>, vector<8x128xf32>
      tpu.vector_store %arg6[%c0_11, %c0_12], %12 {strides = array<i32>} : memref<8x128xf32, #tpu.memory_space<vmem>>, vector<8x128xf32>,
    } else {
    }
    %c0 = arith.constant 0 : index
    %c0_1 = arith.constant 0 : index
    %3 = vector.load %arg6[%c0, %c0_1] : memref<8x128xf32, #tpu.memory_space<vmem>>, vector<8x128xf32>
    %c0_2 = arith.constant 0 : index
    %c0_3 = arith.constant 0 : index
    %4 = vector.load %arg2[%c0_2, %c0_3] : memref<8x32xf32, #tpu.memory_space<vmem>>, vector<8x32xf32>
    %c0_4 = arith.constant 0 : index
    %c0_5 = arith.constant 0 : index
    %5 = vector.load %arg3[%c0_4, %c0_5] : memref<32x128xf32, #tpu.memory_space<vmem>>, vector<32x128xf32>
    %cst = arith.constant dense<0.000000e+00> : vector<8x128xf32>
    %6 = tpu.matmul %4, %5, %cst {dimension_numbers = #tpu.dot_dimension_numbers<[1], [0], [0], [1], [0, 0, 1, 1], [], []>} : vector<8x32xf32>, vector<32x128xf32>, vector<8x128xf32> -> vector<8x128xf32>
    %7 = arith.addf %3, %6 : vector<8x128xf32>
    %c0_6 = arith.constant 0 : index
    %c0_7 = arith.constant 0 : index
    %8 = vector.load %arg6[%c0_6, %c0_7] : memref<8x128xf32, #tpu.memory_space<vmem>>, vector<8x128xf32>
    tpu.vector_store %arg6[%c0_6, %c0_7], %7 {strides = array<i32>} : memref<8x128xf32, #tpu.memory_space<vmem>>, vector<8x128xf32>,
    %c0_i32_8 = arith.constant 0 : i32
    %9 = arith.cmpi eq, %arg1, %c0_i32_8 : i32
    %10 = arith.extui %9 : i1 to i32
    %c0_i32_9 = arith.constant 0 : i32
    %11 = arith.cmpi ne, %10, %c0_i32_9 : i32
    scf.if %11 {
      %c0_10 = arith.constant 0 : index
      %c0_11 = arith.constant 0 : index
      %12 = vector.load %arg6[%c0_10, %c0_11] : memref<8x128xf32, #tpu.memory_space<vmem>>, vector<8x128xf32>
      %13 = vector.extract_strided_slice %12 {offsets = [0, 0], sizes = [8, 2], strides = [1, 1]} : vector<8x128xf32> to vector<8x2xf32>
      %c0_12 = arith.constant 0 : index
      %c0_13 = arith.constant 0 : index
      %14 = vector.load %arg4[%c0_12, %c0_13] : memref<1x2xf32, #tpu.memory_space<vmem>>, vector<1x2xf32>
      %15 = vector.broadcast %14 : vector<1x2xf32> to vector<8x2xf32>
      %16 = arith.addf %13, %15 : vector<8x2xf32>
      %c0_14 = arith.constant 0 : index
      %c0_15 = arith.constant 0 : index
      %17 = vector.load %arg5[%c0_14, %c0_15] : memref<8x2xf32, #tpu.memory_space<vmem>>, vector<8x2xf32>
      tpu.vector_store %arg5[%c0_14, %c0_15], %16 {strides = array<i32>} : memref<8x2xf32, #tpu.memory_space<vmem>>, vector<8x2xf32>,
    } else {
    }
    return
  }
  func.func @transform_0(%arg0: i32, %arg1: i32) -> (i32, i32) {
    %c0_i32 = arith.constant 0 : i32
    return %arg0, %arg1 : i32, i32
  }
  func.func @transform_1(%arg0: i32, %arg1: i32) -> (i32, i32) {
    %c0_i32 = arith.constant 0 : i32
    %c0_i32_0 = arith.constant 0 : i32
    return %arg1, %c0_i32 : i32, i32
  }
  func.func @transform_2(%arg0: i32, %arg1: i32) -> (i32, i32) {
    %c0_i32 = arith.constant 0 : i32
    %c0_i32_0 = arith.constant 0 : i32
    %c0_i32_1 = arith.constant 0 : i32
    return %c0_i32, %c0_i32_0 : i32, i32
  }
  func.func @transform_3(%arg0: i32, %arg1: i32) -> (i32, i32) {
    %c0_i32 = arith.constant 0 : i32
    %c0_i32_0 = arith.constant 0 : i32
    return %arg0, %c0_i32 : i32, i32
  }
}

</mosaic_0001>

<llo_original>
// kernel: fcnet_forward.1
$region0: #{fcnet_forward.1}
  #allocation0 [shape = 'u32[]', space=smem, size = 0x4, offset = 0x4, fixed_abs, tag = 'smem constant byte address 0x4 - core index']
  #allocation1 [shape = 'u32[144,128]{1,0:T(1,128)}', space=vmem, size = 0x12000, scoped, tag = 'internal scratch']
  #allocation2 [shape = 'f32[8,128]{1,0:T(8,128)}', space=vmem, size = 0x1000, scoped, tag = 'scratch operand']
  %s0 = inlined_call_operand.hbm [shape: f32[8,32], index: 0, kind: input, shape index: {}]
  %s1 = inlined_call_operand.hbm [shape: f32[32,128], index: 1, kind: input, shape index: {}]
  %s2 = inlined_call_operand.vmem [shape: f32[1,2], index: 2, kind: input, shape index: {}]
  %s3 = inlined_call_operand.vmem [shape: f32[8,2], index: 3, kind: output, shape index: {}]
  %s4 = sld [smem:[#allocation0]]
  $region38: #{fcnet_forward.1} parent=0
    _
  %s6 = ssub.s32 1, %s4
  %s7 = scalar_select 0, %s6, %s4
  $region1: #{fcnet_forward.1} parent=0
    #allocation3 [shape = 'u8[4096]{0}', space=vmem, size = 0x1000, scoped, tag = 'input window, operand 0, single buffered']
    #allocation4 [shape = 's32[1]{0}', space=sflag, size = 0x4, scoped, tag = 'scoped memory for fcnet_forward.1']
    #allocation5 [shape = 'u8[16384]{0}', space=vmem, size = 0x4000, scoped, tag = 'input window, operand 1, single buffered']
    #allocation6 [shape = 's32[1]{0}', space=sflag, size = 0x4, scoped, tag = 'scoped memory for fcnet_forward.1']
    %8 = vsyncpa [#allocation4], 0
    %9 = vsyncpa [#allocation6], 0
    // Predicated region
    $region2: #{fcnet_forward.1} parent=1 // pred_check
      _
    $region3: #{fcnet_forward.1} parent=1 // pred_check_branch
      %11 = sbr.rel (0) target = $region5
    $region4: #{fcnet_forward.1} parent=1 // pred_region
      %s13 = ssub.s32 128, 128
      %14 = vsyncadd [#allocation4], %s13
      %s16 = sshll.u32 [#allocation3], 4
      %s17 = int_to_ptr.vmem [resolvable:$true] %s16
      %19 = dma.hbm_to_vmem [thread:$0]  %s0, 128, %s17, [#allocation4]
    $region5: #{fcnet_forward.1} parent=1 // pred_fallthru
      _
    // Predicated region
    $region6: #{fcnet_forward.1} parent=1 // pred_check
      _
    $region7: #{fcnet_forward.1} parent=1 // pred_check_branch
      %21 = sbr.rel (0) target = $region9
    $region8: #{fcnet_forward.1} parent=1 // pred_region
      %s23 = ssub.s32 512, 512
      %24 = vsyncadd [#allocation6], %s23
      %s25 = sshll.u32 [#allocation5], 4
      %s26 = int_to_ptr.vmem [resolvable:$true] %s25
      %31 = dma.hbm_to_vmem [thread:$0]  %s1, 512, %s26, [#allocation6], 128, 128, 8
    $region9: #{fcnet_forward.1} parent=1 // pred_fallthru
      _
    // Predicated region
    $region10: #{fcnet_forward.1} parent=1 // pred_check
      _
    $region11: #{fcnet_forward.1} parent=1 // pred_check_branch
      %33 = sbr.rel (0) target = $region13
    $region12: #{fcnet_forward.1} parent=1 // pred_region
      _
    $region13: #{fcnet_forward.1} parent=1 // pred_fallthru
      _
    // Predicated region
    $region14: #{fcnet_forward.1} parent=1 // pred_check
      _
    $region15: #{fcnet_forward.1} parent=1 // pred_check_branch
      %35 = sbr.rel (0) target = $region17
    $region16: #{fcnet_forward.1} parent=1 // pred_region
      %36 = dma.done [#allocation4], 128
    $region17: #{fcnet_forward.1} parent=1 // pred_fallthru
      _
    // Predicated region
    $region18: #{fcnet_forward.1} parent=1 // pred_check
      _
    $region19: #{fcnet_forward.1} parent=1 // pred_check_branch
      %38 = sbr.rel (0) target = $region21
    $region20: #{fcnet_forward.1} parent=1 // pred_region
      %39 = dma.done [#allocation6], 512
    $region21: #{fcnet_forward.1} parent=1 // pred_fallthru
      _
    %p40 = scmp.eq.s32.totalorder 0, 0
    // Predicated region
    $region22: #{fcnet_forward.1} parent=1 // pred_check
      %p41 = pneg %p40
    $region23: #{fcnet_forward.1} parent=1 // pred_check_branch
      %43 = sbr.rel (%p41) target = $region25
    $region24: #{fcnet_forward.1} parent=1 // pred_region
      %44 = vst [vmem:[#allocation2] sm:$0xff] 0.0
    $region25: #{fcnet_forward.1} parent=1 // pred_fallthru
      _
    %v45 = vld [vmem:[#allocation2] sm:$0xff]
    %v46 = vld [vmem:[#allocation3] sm:$0xff]
    %v47 = vld [vmem:[#allocation5] sm:$0xff]
    %v48 = vld [vmem:[#allocation5 + $0x8] sm:$0xff]
    %v49 = vld [vmem:[#allocation5 + $0x10] sm:$0xff]
    %v50 = vld [vmem:[#allocation5 + $0x18] sm:$0xff]
    %vm51 = vcmask 261120
    %v53 = vsel %vm51, %v46, 0
    %55 = vmatprep.subr.mxu0 0.0
    %56 = vmatpush1.msra.mxu0 %v47
    %57 = vmatprep.subr.mxu0 0.0
    %58 = vmatpush1.msra.mxu0 %v48
    %59 = vmatprep.subr.mxu0 0.0
    %60 = vmatpush1.msra.mxu0 %v49
    %61 = vmatprep.subr.mxu0 0.0
    %62 = vmatpush1.msra.mxu0 %v50
    %63 = vmatprep.subr.mxu0 0.0
    %64 = vmatpush1.msra.mxu0 0.0
    %65 = vmatprep.subr.mxu0 0.0
    %66 = vmatpush1.msra.mxu0 0.0
    %67 = vmatprep.subr.mxu0 0.0
    %68 = vmatpush1.msra.mxu0 0.0
    %69 = vmatprep.subr.mxu0 0.0
    %70 = vmatpush1.msra.mxu0 0.0
    %71 = vmatprep.subr.mxu0 0.0
    %72 = vmatpush1.msra.mxu0 0.0
    %73 = vmatprep.subr.mxu0 0.0
    %74 = vmatpush1.msra.mxu0 0.0
    %75 = vmatprep.subr.mxu0 0.0
    %76 = vmatpush1.msra.mxu0 0.0
    %77 = vmatprep.subr.mxu0 0.0
    %78 = vmatpush1.msra.mxu0 0.0
    %79 = vmatprep.subr.mxu0 0.0
    %80 = vmatpush1.msra.mxu0 0.0
    %81 = vmatprep.subr.mxu0 0.0
    %82 = vmatpush1.msra.mxu0 0.0
    %83 = vmatprep.subr.mxu0 0.0
    %84 = vmatpush1.msra.mxu0 0.0
    %85 = vmatprep.subr.mxu0 0.0
    %86 = vmatpush1.msra.mxu0 0.0
    %87 = vmatprep.subr.mxu0 0.0
    %88 = vmatpush1.msra.mxu0 0.0
    %89 = vmatprep.subr.mxu0 0.0
    %90 = vmatpush1.msra.mxu0 0.0
    %91 = vmatprep.subr.mxu0 0.0
    %92 = vmatpush1.msra.mxu0 0.0
    %93 = vmatprep.subr.mxu0 0.0
    %94 = vmatpush1.msra.mxu0 0.0
    %95 = vmatprep.subr.mxu0 0.0
    %96 = vmatpush1.msra.mxu0 0.0
    %97 = vmatprep.subr.mxu0 0.0
    %98 = vmatpush1.msra.mxu0 0.0
    %99 = vmatprep.subr.mxu0 0.0
    %100 = vmatpush1.msra.mxu0 0.0
    %101 = vmatprep.subr.mxu0 0.0
    %102 = vmatpush1.msra.mxu0 0.0
    %103 = vmatprep.subr.mxu0 0.0
    %104 = vmatpush1.msra.mxu0 0.0
    %105 = vmatprep.subr.mxu0 0.0
    %106 = vmatpush1.msra.mxu0 0.0
    %107 = vmatprep.subr.mxu0 0.0
    %108 = vmatpush1.msra.mxu0 0.0
    %109 = vmatprep.subr.mxu0 0.0
    %110 = vmatpush1.msra.mxu0 0.0
    %111 = vmatprep.subr.mxu0 0.0
    %112 = vmatpush1.msra.mxu0 0.0
    %113 = vmatprep.subr.mxu0 0.0
    %114 = vmatpush1.msra.mxu0 0.0
    %115 = vmatprep.subr.mxu0 0.0
    %116 = vmatpush1.msra.mxu0 0.0
    %117 = vmatprep.subr.mxu0 0.0
    %118 = vmatpush1.msra.mxu0 0.0
    %119 = vmatprep.mubr.f32.mxu0 0.0
    %120 = vmatmul.mubr.f32.gmra.mrb[0].mxu0 %v53
    %v121 = vpop.f32.mrb[0].mxu0
    %v122 = vadd.f32 0.0, %v121
    %v123 = vpop.f32.mrb[0].mxu0
    %124 = vdwg.mxu0
    %v125 = vadd.f32 %v45, %v122
    %126 = vst [vmem:[#allocation2] sm:$0xff] %v125
    // Predicated region
    $region26: #{fcnet_forward.1} parent=1 // pred_check
      %p127 = pneg %p40
    $region27: #{fcnet_forward.1} parent=1 // pred_check_branch
      %129 = sbr.rel (%p127) target = $region29
    $region28: #{fcnet_forward.1} parent=1 // pred_region
      %v130 = vld [vmem:[#allocation2] sm:$0xff]
      %v131 = vld [vmem:[%s2] sm:$0x1]
      %v133 = vlaneseq
      %v134 = vshrl.u32 %v133, 7
      %v135 = vsub.s32 0, %v134
      %v136 = vrot.slane %v131, %v135
      %v138 = vadd.f32 %v130, %v136
      %vm139 = vcmask 15360
      %140 = vst.msk [vmem:[%s3] sm:$0xff] %vm139, %v138
    $region29: #{fcnet_forward.1} parent=1 // pred_fallthru
      _
    // Predicated region
    $region30: #{fcnet_forward.1} parent=1 // pred_check
      _
    $region31: #{fcnet_forward.1} parent=1 // pred_check_branch
      %142 = sbr.rel (0) target = $region33
    $region32: #{fcnet_forward.1} parent=1 // pred_region
      _
    $region33: #{fcnet_forward.1} parent=1 // pred_fallthru
      _
    // Predicated region
    $region34: #{fcnet_forward.1} parent=1 // pred_check
      _
    $region35: #{fcnet_forward.1} parent=1 // pred_check_branch
      %144 = sbr.rel (0) target = $region37
    $region36: #{fcnet_forward.1} parent=1 // pred_region
      _
    $region37: #{fcnet_forward.1} parent=1 // pred_fallthru
      _
    %145 = vsyncpa [#allocation4], 1
    %146 = vsyncpa [#allocation6], 1

</llo_original>
